<compile_context>
chip_gen: v6e
topology: v6e:2x2x1
jax: 0.10.0
libtpu: 0.0.40
codegen_flags: <defaults>
</compile_context>

<pallas_src>
import jax
import jax.numpy as jnp
from jax.experimental import pallas as pl
from jax.experimental.pallas import tpu as pltpu

N_FFT = 512              # torch.fft.rfft(b, 512) default in iirnet signal.sosfreqz
NF = N_FFT // 2          # 256 lane-dense bins handled in-kernel
N_BINS = N_FFT // 2 + 1  # 257 rfft bins total (Nyquist handled in the wrapper)
K_PAD = 8                # coefficient triple zero-padded to 8 (aligned matmul K)
EPS = 1e-8


def _round_up(x, m):
    return (x + m - 1) // m * m


def _logmag_mse_kernel(comps_ref, basis_ref, out_ref):
    """comps_ref: (4*n_sec, TB, K_PAD), basis_ref: (K_PAD, 2*NF), out_ref: (1, 8, 128)."""
    n_sec = comps_ref.shape[0] // 4
    tb = comps_ref.shape[1]
    basis = basis_ref[...]                                   # (K_PAD, 2*NF)

    def mag2_prod(g):
        # prod_s |poly_s(e^{-jw})|^2 over the n_sec sections of component group g.
        # Single MXU matmul for all sections of this group (free leading-dim merge).
        flat = comps_ref[g * n_sec:(g + 1) * n_sec].reshape(n_sec * tb, K_PAD)
        ri = jnp.dot(flat, basis,
                     preferred_element_type=jnp.float32)     # (n_sec*tb, 2*NF)
        sq = ri * ri
        m2 = sq[:, :NF] + sq[:, NF:]                         # re^2 + im^2, (n_sec*tb, NF)
        acc = m2[0:tb]
        for s in range(1, n_sec):                            # static, unrolled
            acc = acc * m2[s * tb:(s + 1) * tb]
        return acc                                           # (tb, NF)

    num_in = mag2_prod(0)
    den_in = mag2_prod(1)
    num_tg = mag2_prod(2)
    den_tg = mag2_prod(3)

    # Single (approx, EUP) reciprocal per source instead of per-section divides.
    mag_in = jnp.sqrt(num_in * pl.reciprocal(den_in, approx=True))
    mag_tg = jnp.sqrt(num_tg * pl.reciprocal(den_tg, approx=True))
    d = 20.0 * jnp.log10(mag_in + EPS) - 20.0 * jnp.log10(mag_tg + EPS)

    tile_sum = jnp.sum(d * d, axis=1, keepdims=True)         # (tb, 1)
    tile_sum = jnp.sum(tile_sum, axis=0, keepdims=True)      # (1, 1)
    # Lane-dense unmasked store of the per-tile partial sum.
    out_ref[...] = jnp.broadcast_to(tile_sum.reshape(1, 1, 1), out_ref.shape)


def _components(sos, bs_pad):
    """(bs, n_sec, 6) -> (2*n_sec, bs_pad, K_PAD): [num sections..., den sections...]."""
    bs, n_sec, _ = sos.shape
    num = jnp.transpose(sos[:, :, 0:3], (1, 0, 2))           # (n_sec, bs, 3)
    den = jnp.transpose(sos[:, :, 3:6], (1, 0, 2))
    c = jnp.concatenate([num, den], axis=0).astype(jnp.float32)
    c = jnp.pad(c, ((0, 0), (0, bs_pad - bs), (0, K_PAD - 3)))
    if bs_pad > bs:
        # Identity sections for padded batch rows -> H == 1 for both input and
        # target -> exactly zero contribution to the loss sum.
        c = c.at[:, bs:, 0].set(1.0)
    return c


def _trig_basis():
    k = jnp.arange(NF, dtype=jnp.float32)
    w = (2.0 * jnp.pi / N_FFT) * k
    basis = jnp.zeros((K_PAD, 2 * NF), jnp.float32)
    basis = basis.at[0, :NF].set(1.0)
    basis = basis.at[1, :NF].set(jnp.cos(w))
    basis = basis.at[2, :NF].set(jnp.cos(2.0 * w))
    basis = basis.at[1, NF:].set(-jnp.sin(w))
    basis = basis.at[2, NF:].set(-jnp.sin(2.0 * w))
    return basis


def _nyquist_logmag(sos):
    # At w = pi, H is real: each section contributes (b0 - b1 + b2)/(a0 - a1 + a2).
    hb = sos[..., 0] - sos[..., 1] + sos[..., 2]
    ha = sos[..., 3] - sos[..., 4] + sos[..., 5]
    h = jnp.prod(hb / ha, axis=-1)
    return 20.0 * jnp.log10(jnp.abs(h) + EPS)


def log_mag_frequency_loss(input_sos, target_sos, *, tile_b=256):
    """Pallas implementation of LogMagFrequencyLoss(priority=False).forward."""
    assert input_sos.shape == target_sos.shape and input_sos.shape[-1] == 6
    bs, n_sec, _ = input_sos.shape
    input_sos = input_sos.astype(jnp.float32)
    target_sos = target_sos.astype(jnp.float32)

    # Batch tile: multiple of 8 sublanes.  Cap so the fused per-group matmul
    # intermediate (n_sec*tb, 2*NF) f32 stays ~2 MiB (well inside the default
    # scoped-VMEM budget on v5e/v6e/v7x, next to the double-buffered inputs).
    tb = min(_round_up(tile_b, 8), _round_up(bs, 8))
    tb = min(tb, max(8, _round_up(1024 // max(n_sec, 1), 8)))
    bs_pad = _round_up(bs, tb)
    num_tiles = bs_pad // tb

    comps = jnp.concatenate(
        [_components(input_sos, bs_pad), _components(target_sos, bs_pad)], axis=0
    )                                                        # (4*n_sec, bs_pad, K_PAD)
    basis = _trig_basis()                                    # (K_PAD, 2*NF)

    partial = pl.pallas_call(
        _logmag_mse_kernel,
        out_shape=jax.ShapeDtypeStruct((num_tiles, 8, 128), jnp.float32),
        grid=(num_tiles,),
        in_specs=[
            pl.BlockSpec((4 * n_sec, tb, K_PAD), lambda i: (0, i, 0)),
            pl.BlockSpec((K_PAD, 2 * NF), lambda i: (0, 0)),  # constant -> no re-DMA
        ],
        out_specs=pl.BlockSpec((1, 8, 128), lambda i: (i, 0, 0)),
        compiler_params=pltpu.CompilerParams(dimension_semantics=("parallel",)),
    )(comps, basis)

    kernel_sum = jnp.sum(partial[:, 0, 0])
    # Nyquist-bin (k = 256) correction, O(bs) scalar work done in plain JAX.
    nyq_diff = _nyquist_logmag(input_sos) - _nyquist_logmag(target_sos)
    total = kernel_sum + jnp.sum(nyq_diff * nyq_diff)
    # mse_loss mean over the *global* batch and all 257 bins.
    return total / (bs * N_BINS)


def reference_loss(input_sos, target_sos, eps=EPS):
    """Pure-JAX reference mirroring the torch.fft.rfft-based sosfreqz path."""
    def sosfreqz(sos):
        b = sos[..., :3]
        a = sos[..., 3:]
        B = jnp.fft.rfft(b, N_FFT, axis=-1)                  # (bs, n_sec, 257)
        A = jnp.fft.rfft(a, N_FFT, axis=-1)
        return jnp.prod(B / A, axis=1)                       # (bs, 257)

    in_mag = 20.0 * jnp.log10(jnp.abs(sosfreqz(input_sos)) + eps)
    tg_mag = 20.0 * jnp.log10(jnp.abs(sosfreqz(target_sos)) + eps)
    return jnp.mean((in_mag - tg_mag) ** 2)


if __name__ == "__main__":
    key = jax.random.PRNGKey(0)

    def make_sos(k, bs, n_sections):
        kb, ka = jax.random.split(k)
        b = 0.5 * jax.random.normal(kb, (bs, n_sections, 3), jnp.float32)
        a12 = 0.3 * jax.random.normal(ka, (bs, n_sections, 2), jnp.float32)
        a0 = jnp.ones((bs, n_sections, 1), jnp.float32)
        return jnp.concatenate([b, a0, a12], axis=-1)        # (bs, n_sections, 6)

    k1, k2, k3, k4, k5, k6 = jax.random.split(key, 6)

    # Case A: bs=2, n_sections=4 (single grid tile, batch padded 2 -> 8).
    in_a, tg_a = make_sos(k1, 2, 4), make_sos(k2, 2, 4)
    loss_a = jax.block_until_ready(log_mag_frequency_loss(in_a, tg_a))
    ref_a = jax.block_until_ready(reference_loss(in_a, tg_a))
    assert jnp.isfinite(loss_a), f"non-finite loss: {loss_a}"
    assert jnp.allclose(loss_a, ref_a, rtol=5e-2, atol=1e-3), f"mismatch: {loss_a} vs {ref_a}"

    # Case B: bs=12 with tile_b=8 -> 2 grid tiles + batch padding.
    in_b, tg_b = make_sos(k3, 12, 4), make_sos(k4, 12, 4)
    loss_b = jax.block_until_ready(log_mag_frequency_loss(in_b, tg_b, tile_b=8))
    ref_b = jax.block_until_ready(reference_loss(in_b, tg_b))
    assert jnp.isfinite(loss_b), f"non-finite loss: {loss_b}"
    assert jnp.allclose(loss_b, ref_b, rtol=5e-2, atol=1e-3), f"mismatch: {loss_b} vs {ref_b}"

    # Case C: bs=5, n_sections=2 (odd batch padding, different section count).
    in_c, tg_c = make_sos(k5, 5, 2), make_sos(k6, 5, 2)
    loss_c = jax.block_until_ready(log_mag_frequency_loss(in_c, tg_c))
    ref_c = jax.block_until_ready(reference_loss(in_c, tg_c))
    assert jnp.isfinite(loss_c), f"non-finite loss: {loss_c}"
    assert jnp.allclose(loss_c, ref_c, rtol=5e-2, atol=1e-3), f"mismatch: {loss_c} vs {ref_c}"

    print("KERNEL_OK")
</pallas_src>

<mosaic_0001>
module attributes {stable_mosaic.version = 11 : i64} {
  func.func @_logmag_mse_kernel(%arg0: i32, %arg1: memref<16x8x8xf32, #tpu.memory_space<vmem>>, %arg2: memref<8x512xf32, #tpu.memory_space<vmem>>, %arg3: memref<1x8x128xf32, #tpu.memory_space<vmem>>) attributes {dimension_semantics = [#tpu.dimension_semantics<parallel>], iteration_bounds = array<i64: 1>, scalar_prefetch = 0 : i64, scratch_operands = 0 : i64, tpu.core_type = #tpu.core_type<tc>, window_params = [{transform_indices = @transform_0, window_bounds = array<i64: 16, 8, 8>}, {pipeline_mode = #tpu.pipeline_mode<synchronous>, transform_indices = @transform_1, window_bounds = array<i64: 8, 512>}, {transform_indices = @transform_2, window_bounds = array<i64: 1, 8, 128>}]} {
    %c0 = arith.constant 0 : index
    %c0_0 = arith.constant 0 : index
    %0 = vector.load %arg2[%c0, %c0_0] : memref<8x512xf32, #tpu.memory_space<vmem>>, vector<8x512xf32>
    %c0_1 = arith.constant 0 : index
    %c0_2 = arith.constant 0 : index
    %c0_3 = arith.constant 0 : index
    %1 = vector.load %arg1[%c0_1, %c0_2, %c0_3] : memref<16x8x8xf32, #tpu.memory_space<vmem>>, vector<4x8x8xf32>
    %2 = vector.shape_cast %1 : vector<4x8x8xf32> to vector<32x8xf32>
    %cst = arith.constant dense<0.000000e+00> : vector<32x512xf32>
    %3 = tpu.matmul %2, %0, %cst {dimension_numbers = #tpu.dot_dimension_numbers<[1], [0], [0], [1], [0, 0, 1, 1], [], []>} : vector<32x8xf32>, vector<8x512xf32>, vector<32x512xf32> -> vector<32x512xf32>
    %4 = arith.mulf %3, %3 : vector<32x512xf32>
    %5 = vector.extract_strided_slice %4 {offsets = [0, 0], sizes = [32, 256], strides = [1, 1]} : vector<32x512xf32> to vector<32x256xf32>
    %6 = vector.extract_strided_slice %4 {offsets = [0, 256], sizes = [32, 256], strides = [1, 1]} : vector<32x512xf32> to vector<32x256xf32>
    %7 = arith.addf %5, %6 : vector<32x256xf32>
    %8 = vector.extract_strided_slice %7 {offsets = [0, 0], sizes = [8, 256], strides = [1, 1]} : vector<32x256xf32> to vector<8x256xf32>
    %9 = vector.extract_strided_slice %7 {offsets = [8, 0], sizes = [8, 256], strides = [1, 1]} : vector<32x256xf32> to vector<8x256xf32>
    %10 = arith.mulf %8, %9 : vector<8x256xf32>
    %11 = vector.extract_strided_slice %7 {offsets = [16, 0], sizes = [8, 256], strides = [1, 1]} : vector<32x256xf32> to vector<8x256xf32>
    %12 = arith.mulf %10, %11 : vector<8x256xf32>
    %13 = vector.extract_strided_slice %7 {offsets = [24, 0], sizes = [8, 256], strides = [1, 1]} : vector<32x256xf32> to vector<8x256xf32>
    %14 = arith.mulf %12, %13 : vector<8x256xf32>
    %c4 = arith.constant 4 : index
    %c0_4 = arith.constant 0 : index
    %c0_5 = arith.constant 0 : index
    %15 = vector.load %arg1[%c4, %c0_4, %c0_5] : memref<16x8x8xf32, #tpu.memory_space<vmem>>, vector<4x8x8xf32>
    %16 = vector.shape_cast %15 : vector<4x8x8xf32> to vector<32x8xf32>
    %cst_6 = arith.constant dense<0.000000e+00> : vector<32x512xf32>
    %17 = tpu.matmul %16, %0, %cst_6 {dimension_numbers = #tpu.dot_dimension_numbers<[1], [0], [0], [1], [0, 0, 1, 1], [], []>} : vector<32x8xf32>, vector<8x512xf32>, vector<32x512xf32> -> vector<32x512xf32>
    %18 = arith.mulf %17, %17 : vector<32x512xf32>
    %19 = vector.extract_strided_slice %18 {offsets = [0, 0], sizes = [32, 256], strides = [1, 1]} : vector<32x512xf32> to vector<32x256xf32>
    %20 = vector.extract_strided_slice %18 {offsets = [0, 256], sizes = [32, 256], strides = [1, 1]} : vector<32x512xf32> to vector<32x256xf32>
    %21 = arith.addf %19, %20 : vector<32x256xf32>
    %22 = vector.extract_strided_slice %21 {offsets = [0, 0], sizes = [8, 256], strides = [1, 1]} : vector<32x256xf32> to vector<8x256xf32>
    %23 = vector.extract_strided_slice %21 {offsets = [8, 0], sizes = [8, 256], strides = [1, 1]} : vector<32x256xf32> to vector<8x256xf32>
    %24 = arith.mulf %22, %23 : vector<8x256xf32>
    %25 = vector.extract_strided_slice %21 {offsets = [16, 0], sizes = [8, 256], strides = [1, 1]} : vector<32x256xf32> to vector<8x256xf32>
    %26 = arith.mulf %24, %25 : vector<8x256xf32>
    %27 = vector.extract_strided_slice %21 {offsets = [24, 0], sizes = [8, 256], strides = [1, 1]} : vector<32x256xf32> to vector<8x256xf32>
    %28 = arith.mulf %26, %27 : vector<8x256xf32>
    %c8 = arith.constant 8 : index
    %c0_7 = arith.constant 0 : index
    %c0_8 = arith.constant 0 : index
    %29 = vector.load %arg1[%c8, %c0_7, %c0_8] : memref<16x8x8xf32, #tpu.memory_space<vmem>>, vector<4x8x8xf32>
    %30 = vector.shape_cast %29 : vector<4x8x8xf32> to vector<32x8xf32>
    %cst_9 = arith.constant dense<0.000000e+00> : vector<32x512xf32>
    %31 = tpu.matmul %30, %0, %cst_9 {dimension_numbers = #tpu.dot_dimension_numbers<[1], [0], [0], [1], [0, 0, 1, 1], [], []>} : vector<32x8xf32>, vector<8x512xf32>, vector<32x512xf32> -> vector<32x512xf32>
    %32 = arith.mulf %31, %31 : vector<32x512xf32>
    %33 = vector.extract_strided_slice %32 {offsets = [0, 0], sizes = [32, 256], strides = [1, 1]} : vector<32x512xf32> to vector<32x256xf32>
    %34 = vector.extract_strided_slice %32 {offsets = [0, 256], sizes = [32, 256], strides = [1, 1]} : vector<32x512xf32> to vector<32x256xf32>
    %35 = arith.addf %33, %34 : vector<32x256xf32>
    %36 = vector.extract_strided_slice %35 {offsets = [0, 0], sizes = [8, 256], strides = [1, 1]} : vector<32x256xf32> to vector<8x256xf32>
    %37 = vector.extract_strided_slice %35 {offsets = [8, 0], sizes = [8, 256], strides = [1, 1]} : vector<32x256xf32> to vector<8x256xf32>
    %38 = arith.mulf %36, %37 : vector<8x256xf32>
    %39 = vector.extract_strided_slice %35 {offsets = [16, 0], sizes = [8, 256], strides = [1, 1]} : vector<32x256xf32> to vector<8x256xf32>
    %40 = arith.mulf %38, %39 : vector<8x256xf32>
    %41 = vector.extract_strided_slice %35 {offsets = [24, 0], sizes = [8, 256], strides = [1, 1]} : vector<32x256xf32> to vector<8x256xf32>
    %42 = arith.mulf %40, %41 : vector<8x256xf32>
    %c12 = arith.constant 12 : index
    %c0_10 = arith.constant 0 : index
    %c0_11 = arith.constant 0 : index
    %43 = vector.load %arg1[%c12, %c0_10, %c0_11] : memref<16x8x8xf32, #tpu.memory_space<vmem>>, vector<4x8x8xf32>
    %44 = vector.shape_cast %43 : vector<4x8x8xf32> to vector<32x8xf32>
    %cst_12 = arith.constant dense<0.000000e+00> : vector<32x512xf32>
    %45 = tpu.matmul %44, %0, %cst_12 {dimension_numbers = #tpu.dot_dimension_numbers<[1], [0], [0], [1], [0, 0, 1, 1], [], []>} : vector<32x8xf32>, vector<8x512xf32>, vector<32x512xf32> -> vector<32x512xf32>
    %46 = arith.mulf %45, %45 : vector<32x512xf32>
    %47 = vector.extract_strided_slice %46 {offsets = [0, 0], sizes = [32, 256], strides = [1, 1]} : vector<32x512xf32> to vector<32x256xf32>
    %48 = vector.extract_strided_slice %46 {offsets = [0, 256], sizes = [32, 256], strides = [1, 1]} : vector<32x512xf32> to vector<32x256xf32>
    %49 = arith.addf %47, %48 : vector<32x256xf32>
    %50 = vector.extract_strided_slice %49 {offsets = [0, 0], sizes = [8, 256], strides = [1, 1]} : vector<32x256xf32> to vector<8x256xf32>
    %51 = vector.extract_strided_slice %49 {offsets = [8, 0], sizes = [8, 256], strides = [1, 1]} : vector<32x256xf32> to vector<8x256xf32>
    %52 = arith.mulf %50, %51 : vector<8x256xf32>
    %53 = vector.extract_strided_slice %49 {offsets = [16, 0], sizes = [8, 256], strides = [1, 1]} : vector<32x256xf32> to vector<8x256xf32>
    %54 = arith.mulf %52, %53 : vector<8x256xf32>
    %55 = vector.extract_strided_slice %49 {offsets = [24, 0], sizes = [8, 256], strides = [1, 1]} : vector<32x256xf32> to vector<8x256xf32>
    %56 = arith.mulf %54, %55 : vector<8x256xf32>
    %57 = tpu.reciprocal %28 {approx = true} : vector<8x256xf32> -> vector<8x256xf32>
    %58 = arith.mulf %14, %57 : vector<8x256xf32>
    %59 = math.sqrt %58 : vector<8x256xf32>
    %60 = tpu.reciprocal %56 {approx = true} : vector<8x256xf32> -> vector<8x256xf32>
    %61 = arith.mulf %42, %60 : vector<8x256xf32>
    %62 = math.sqrt %61 : vector<8x256xf32>
    %cst_13 = arith.constant 9.99999993E-9 : f32
    %63 = vector.broadcast %cst_13 : f32 to vector<8x256xf32>
    %64 = arith.addf %59, %63 : vector<8x256xf32>
    %65 = math.log %64 : vector<8x256xf32>
    %cst_14 = arith.constant 0.434294492 : f32
    %66 = vector.broadcast %cst_14 : f32 to vector<8x256xf32>
    %67 = arith.mulf %65, %66 : vector<8x256xf32>
    %cst_15 = arith.constant 2.000000e+01 : f32
    %68 = vector.broadcast %cst_15 : f32 to vector<8x256xf32>
    %69 = arith.mulf %68, %67 : vector<8x256xf32>
    %cst_16 = arith.constant 9.99999993E-9 : f32
    %70 = vector.broadcast %cst_16 : f32 to vector<8x256xf32>
    %71 = arith.addf %62, %70 : vector<8x256xf32>
    %72 = math.log %71 : vector<8x256xf32>
    %cst_17 = arith.constant 0.434294492 : f32
    %73 = vector.broadcast %cst_17 : f32 to vector<8x256xf32>
    %74 = arith.mulf %72, %73 : vector<8x256xf32>
    %cst_18 = arith.constant 2.000000e+01 : f32
    %75 = vector.broadcast %cst_18 : f32 to vector<8x256xf32>
    %76 = arith.mulf %75, %74 : vector<8x256xf32>
    %77 = arith.subf %69, %76 : vector<8x256xf32>
    %78 = arith.mulf %77, %77 : vector<8x256xf32>
    %cst_19 = arith.constant dense<0.000000e+00> : vector<8xf32>
    %79 = vector.multi_reduction <add>, %78, %cst_19 [1] : vector<8x256xf32> to vector<8xf32>
    %80 = vector.shape_cast %79 : vector<8xf32> to vector<8x1xf32>
    %cst_20 = arith.constant dense<0.000000e+00> : vector<1xf32>
    %81 = vector.multi_reduction <add>, %80, %cst_20 [0] : vector<8x1xf32> to vector<1xf32>
    %82 = vector.shape_cast %81 : vector<1xf32> to vector<1x1xf32>
    %83 = vector.shape_cast %82 : vector<1x1xf32> to vector<1x1x1xf32>
    %84 = vector.shape_cast %83 : vector<1x1x1xf32> to vector<1x1x1xf32>
    %85 = vector.broadcast %84 : vector<1x1x1xf32> to vector<1x8x128xf32>
    %c0_21 = arith.constant 0 : index
    %c0_22 = arith.constant 0 : index
    %c0_23 = arith.constant 0 : index
    %86 = vector.load %arg3[%c0_21, %c0_22, %c0_23] : memref<1x8x128xf32, #tpu.memory_space<vmem>>, vector<1x8x128xf32>
    tpu.vector_store %arg3[%c0_21, %c0_22, %c0_23], %85 {strides = array<i32>} : memref<1x8x128xf32, #tpu.memory_space<vmem>>, vector<1x8x128xf32>,
    return
  }
  func.func @transform_0(%arg0: i32) -> (i32, i32, i32) {
    %c0_i32 = arith.constant 0 : i32
    %c0_i32_0 = arith.constant 0 : i32
    %c0_i32_1 = arith.constant 0 : i32
    return %c0_i32, %arg0, %c0_i32_0 : i32, i32, i32
  }
  func.func @transform_1(%arg0: i32) -> (i32, i32) {
    %c0_i32 = arith.constant 0 : i32
    %c0_i32_0 = arith.constant 0 : i32
    %c0_i32_1 = arith.constant 0 : i32
    return %c0_i32, %c0_i32_0 : i32, i32
  }
  func.func @transform_2(%arg0: i32) -> (i32, i32, i32) {
    %c0_i32 = arith.constant 0 : i32
    %c0_i32_0 = arith.constant 0 : i32
    %c0_i32_1 = arith.constant 0 : i32
    return %arg0, %c0_i32, %c0_i32_0 : i32, i32, i32
  }
}

</mosaic_0001>

<llo_original>
// kernel: tpu_custom_call.1
$region0: #{tpu_custom_call.1}
  #allocation0 [shape = 'u32[]', space=smem, size = 0x4, offset = 0x4, fixed_abs, tag = 'smem constant byte address 0x4 - core index']
  #allocation1 [shape = 'u32[144,128]{1,0:T(1,128)}', space=vmem, size = 0x12000, scoped, tag = 'internal scratch']
  %s0 = inlined_call_operand.vmem [shape: f32[16,8,8], index: 0, kind: input, shape index: {}]
  %s1 = inlined_call_operand.vmem [shape: f32[8,512], index: 1, kind: input, shape index: {}]
  %s2 = inlined_call_operand.hbm [shape: f32[1,8,128], index: 2, kind: output, shape index: {}]
  %s3 = sld [smem:[#allocation0]]
  $region18: #{tpu_custom_call.1} parent=0
    _
  %s5 = ssub.s32 1, %s3
  %s6 = scalar_select 0, %s5, %s3
  $region1: #{tpu_custom_call.1} parent=0
    #allocation2 [shape = 'u8[4096]{0}', space=vmem, size = 0x1000, scoped, tag = 'output window, operand 0, single buffered']
    #allocation3 [shape = 's32[1]{0}', space=sflag, size = 0x4, scoped, tag = 'scoped memory for tpu_custom_call.1']
    %7 = vsyncpa [#allocation3], 0
    // Predicated region
    $region2: #{tpu_custom_call.1} parent=1 // pred_check
      _
    $region3: #{tpu_custom_call.1} parent=1 // pred_check_branch
      %9 = sbr.rel (0) target = $region5
    $region4: #{tpu_custom_call.1} parent=1 // pred_region
      _
    $region5: #{tpu_custom_call.1} parent=1 // pred_fallthru
      _
    // Predicated region
    $region6: #{tpu_custom_call.1} parent=1 // pred_check
      _
    $region7: #{tpu_custom_call.1} parent=1 // pred_check_branch
      %11 = sbr.rel (0) target = $region9
    $region8: #{tpu_custom_call.1} parent=1 // pred_region
      _
    $region9: #{tpu_custom_call.1} parent=1 // pred_fallthru
      _
    %v12 = vld [vmem:[%s1] sm:$0xff]
    %v13 = vld [vmem:[%s1 + $0x8] sm:$0xff]
    %v14 = vld [vmem:[%s1 + $0x10] sm:$0xff]
    %v15 = vld [vmem:[%s1 + $0x18] sm:$0xff]
    %v16 = vld [vmem:[%s0] sm:$0xff]
    %v17 = vld [vmem:[%s0 + $0x8] sm:$0xff]
    %v18 = vld [vmem:[%s0 + $0x10] sm:$0xff]
    %v19 = vld [vmem:[%s0 + $0x18] sm:$0xff]
    %vm20 = vcmask 64512
    %v22 = vsel %vm20, %v16, 0
    %v25 = vsel %vm20, %v17, 0
    %v28 = vsel %vm20, %v18, 0
    %v31 = vsel %vm20, %v19, 0
    %33 = vmatprep.subr.mxu0 0.0
    %34 = vmatpush1.msra.mxu0 0.0
    %35 = vmatprep.subr.mxu0 0.0
    %36 = vmatpush1.msra.mxu0 0.0
    %37 = vmatprep.subr.mxu0 0.0
    %38 = vmatpush1.msra.mxu0 0.0
    %39 = vmatprep.subr.mxu0 0.0
    %40 = vmatpush1.msra.mxu0 0.0
    %41 = vmatprep.subr.mxu0 0.0
    %42 = vmatpush1.msra.mxu0 0.0
    %43 = vmatprep.subr.mxu0 0.0
    %44 = vmatpush1.msra.mxu0 0.0
    %45 = vmatprep.subr.mxu0 0.0
    %46 = vmatpush1.msra.mxu0 0.0
    %47 = vmatprep.subr.mxu0 0.0
    %48 = vmatpush1.msra.mxu0 0.0
    %49 = vmatprep.subr.mxu0 0.0
    %50 = vmatpush1.msra.mxu0 0.0
    %51 = vmatprep.subr.mxu0 0.0
    %52 = vmatpush1.msra.mxu0 0.0
    %53 = vmatprep.subr.mxu0 0.0
    %54 = vmatpush1.msra.mxu0 0.0
    %55 = vmatprep.subr.mxu0 0.0
    %56 = vmatpush1.msra.mxu0 0.0
    %57 = vmatprep.subr.mxu0 0.0
    %58 = vmatpush1.msra.mxu0 0.0
    %59 = vmatprep.subr.mxu0 0.0
    %60 = vmatpush1.msra.mxu0 0.0
    %61 = vmatprep.subr.mxu0 0.0
    %62 = vmatpush1.msra.mxu0 0.0
    %63 = vmatprep.subr.mxu0 %v13
    %64 = vmatpush1.msra.mxu0 %v12
    %65 = vmatprep.subr.mxu0 0.0
    %66 = vmatpush2.msra.mxu0 0.0
    %67 = vmatprep.subr.mxu0 0.0
    %68 = vmatpush2.msra.mxu0 0.0
    %69 = vmatprep.subr.mxu0 0.0
    %70 = vmatpush2.msra.mxu0 0.0
    %71 = vmatprep.subr.mxu0 0.0
    %72 = vmatpush2.msra.mxu0 0.0
    %73 = vmatprep.subr.mxu0 0.0
    %74 = vmatpush2.msra.mxu0 0.0
    %75 = vmatprep.subr.mxu0 0.0
    %76 = vmatpush2.msra.mxu0 0.0
    %77 = vmatprep.subr.mxu0 0.0
    %78 = vmatpush2.msra.mxu0 0.0
    %79 = vmatprep.subr.mxu0 0.0
    %80 = vmatpush2.msra.mxu0 0.0
    %81 = vmatprep.subr.mxu0 0.0
    %82 = vmatpush2.msra.mxu0 0.0
    %83 = vmatprep.subr.mxu0 0.0
    %84 = vmatpush2.msra.mxu0 0.0
    %85 = vmatprep.subr.mxu0 0.0
    %86 = vmatpush2.msra.mxu0 0.0
    %87 = vmatprep.subr.mxu0 0.0
    %88 = vmatpush2.msra.mxu0 0.0
    %89 = vmatprep.subr.mxu0 0.0
    %90 = vmatpush2.msra.mxu0 0.0
    %91 = vmatprep.subr.mxu0 0.0
    %92 = vmatpush2.msra.mxu0 0.0
    %93 = vmatprep.subr.mxu0 0.0
    %94 = vmatpush2.msra.mxu0 0.0
    %95 = vmatprep.subr.mxu0 0.0
    %96 = vmatpush2.msra.mxu0 0.0
    %97 = vmatprep.mubr.f32.mxu0 0.0
    %98 = vmatmul.mubr.f32.gmra.mxu0 %v22
    %v99 = vpop.f32.mrf.mxu0
    %v100 = vadd.f32 0.0, %v99
    %v101 = vpop.f32.mrf.mxu0
    %v102 = vadd.f32 0.0, %v101
    %103 = vmatprep.mubr.f32.mxu0 0.0
    %104 = vmatmul.mubr.f32.gmra.mxu0 %v25
    %v105 = vpop.f32.mrf.mxu0
    %v106 = vadd.f32 0.0, %v105
    %v107 = vpop.f32.mrf.mxu0
    %v108 = vadd.f32 0.0, %v107
    %109 = vmatprep.mubr.f32.mxu0 0.0
    %110 = vmatmul.mubr.f32.gmra.mxu0 %v28
    %v111 = vpop.f32.mrf.mxu0
    %v112 = vadd.f32 0.0, %v111
    %v113 = vpop.f32.mrf.mxu0
    %v114 = vadd.f32 0.0, %v113
    %115 = vmatprep.mubr.f32.mxu0 0.0
    %116 = vmatmul.mubr.f32.gmra.mxu0 %v31
    %v117 = vpop.f32.mrf.mxu0
    %v118 = vadd.f32 0.0, %v117
    %v119 = vpop.f32.mrf.mxu0
    %v120 = vadd.f32 0.0, %v119
    %121 = vdwg.mxu0
    %122 = vmatprep.subr.mxu0 0.0
    %123 = vmatpush1.msra.mxu0 0.0
    %124 = vmatprep.subr.mxu0 0.0
    %125 = vmatpush1.msra.mxu0 0.0
    %126 = vmatprep.subr.mxu0 0.0
    %127 = vmatpush1.msra.mxu0 0.0
    %128 = vmatprep.subr.mxu0 0.0
    %129 = vmatpush1.msra.mxu0 0.0
    %130 = vmatprep.subr.mxu0 0.0
    %131 = vmatpush1.msra.mxu0 0.0
    %132 = vmatprep.subr.mxu0 0.0
    %133 = vmatpush1.msra.mxu0 0.0
    %134 = vmatprep.subr.mxu0 0.0
    %135 = vmatpush1.msra.mxu0 0.0
    %136 = vmatprep.subr.mxu0 0.0
    %137 = vmatpush1.msra.mxu0 0.0
    %138 = vmatprep.subr.mxu0 0.0
    %139 = vmatpush1.msra.mxu0 0.0
    %140 = vmatprep.subr.mxu0 0.0
    %141 = vmatpush1.msra.mxu0 0.0
    %142 = vmatprep.subr.mxu0 0.0
    %143 = vmatpush1.msra.mxu0 0.0
    %144 = vmatprep.subr.mxu0 0.0
    %145 = vmatpush1.msra.mxu0 0.0
    %146 = vmatprep.subr.mxu0 0.0
    %147 = vmatpush1.msra.mxu0 0.0
    %148 = vmatprep.subr.mxu0 0.0
    %149 = vmatpush1.msra.mxu0 0.0
    %150 = vmatprep.subr.mxu0 0.0
    %151 = vmatpush1.msra.mxu0 0.0
    %152 = vmatprep.subr.mxu0 %v15
    %153 = vmatpush1.msra.mxu0 %v14
    %154 = vmatprep.subr.mxu0 0.0
    %155 = vmatpush2.msra.mxu0 0.0
    %156 = vmatprep.subr.mxu0 0.0
    %157 = vmatpush2.msra.mxu0 0.0
    %158 = vmatprep.subr.mxu0 0.0
    %159 = vmatpush2.msra.mxu0 0.0
    %160 = vmatprep.subr.mxu0 0.0
    %161 = vmatpush2.msra.mxu0 0.0
    %162 = vmatprep.subr.mxu0 0.0
    %163 = vmatpush2.msra.mxu0 0.0
    %164 = vmatprep.subr.mxu0 0.0
    %165 = vmatpush2.msra.mxu0 0.0
    %166 = vmatprep.subr.mxu0 0.0
    %167 = vmatpush2.msra.mxu0 0.0
    %168 = vmatprep.subr.mxu0 0.0
    %169 = vmatpush2.msra.mxu0 0.0
    %170 = vmatprep.subr.mxu0 0.0
    %171 = vmatpush2.msra.mxu0 0.0
    %172 = vmatprep.subr.mxu0 0.0
    %173 = vmatpush2.msra.mxu0 0.0
    %174 = vmatprep.subr.mxu0 0.0
    %175 = vmatpush2.msra.mxu0 0.0
    %176 = vmatprep.subr.mxu0 0.0
    %177 = vmatpush2.msra.mxu0 0.0
    %178 = vmatprep.subr.mxu0 0.0
    %179 = vmatpush2.msra.mxu0 0.0
    %180 = vmatprep.subr.mxu0 0.0
    %181 = vmatpush2.msra.mxu0 0.0
    %182 = vmatprep.subr.mxu0 0.0
    %183 = vmatpush2.msra.mxu0 0.0
    %184 = vmatprep.subr.mxu0 0.0
    %185 = vmatpush2.msra.mxu0 0.0
    %186 = vmatprep.mubr.f32.mxu0 0.0
    %187 = vmatmul.mubr.f32.gmra.mxu0 %v22
    %v188 = vpop.f32.mrf.mxu0
    %v189 = vadd.f32 0.0, %v188
    %v190 = vpop.f32.mrf.mxu0
    %v191 = vadd.f32 0.0, %v190
    %192 = vmatprep.mubr.f32.mxu0 0.0
    %193 = vmatmul.mubr.f32.gmra.mxu0 %v25
    %v194 = vpop.f32.mrf.mxu0
    %v195 = vadd.f32 0.0, %v194
    %v196 = vpop.f32.mrf.mxu0
    %v197 = vadd.f32 0.0, %v196
    %198 = vmatprep.mubr.f32.mxu0 0.0
    %199 = vmatmul.mubr.f32.gmra.mxu0 %v28
    %v200 = vpop.f32.mrf.mxu0
    %v201 = vadd.f32 0.0, %v200
    %v202 = vpop.f32.mrf.mxu0
    %v203 = vadd.f32 0.0, %v202
    %204 = vmatprep.mubr.f32.mxu0 0.0
    %205 = vmatmul.mubr.f32.gmra.mxu0 %v31
    %v206 = vpop.f32.mrf.mxu0
    %v207 = vadd.f32 0.0, %v206
    %v208 = vpop.f32.mrf.mxu0
    %v209 = vadd.f32 0.0, %v208
    %210 = vdwg.mxu0
    %v211 = vmul.f32 %v100, %v100
    %v212 = vmul.f32 %v102, %v102
    %v213 = vmul.f32 %v189, %v189
    %v214 = vmul.f32 %v191, %v191
    %v215 = vmul.f32 %v106, %v106
    %v216 = vmul.f32 %v108, %v108
    %v217 = vmul.f32 %v195, %v195
    %v218 = vmul.f32 %v197, %v197
    %v219 = vmul.f32 %v112, %v112
    %v220 = vmul.f32 %v114, %v114
    %v221 = vmul.f32 %v201, %v201
    %v222 = vmul.f32 %v203, %v203
    %v223 = vmul.f32 %v118, %v118
    %v224 = vmul.f32 %v120, %v120
    %v225 = vmul.f32 %v207, %v207
    %v226 = vmul.f32 %v209, %v209
    %v227 = vadd.f32 %v211, %v213
    %v228 = vadd.f32 %v212, %v214
    %v229 = vadd.f32 %v215, %v217
    %v230 = vadd.f32 %v216, %v218
    %v231 = vadd.f32 %v219, %v221
    %v232 = vadd.f32 %v220, %v222
    %v233 = vadd.f32 %v223, %v225
    %v234 = vadd.f32 %v224, %v226
    %v235 = vmul.f32 %v227, %v229
    %v236 = vmul.f32 %v228, %v230
    %v237 = vmul.f32 %v235, %v231
    %v238 = vmul.f32 %v236, %v232
    %v239 = vmul.f32 %v237, %v233
    %v240 = vmul.f32 %v238, %v234
    %s241 = scalar_lea.vmem %s0, 32
    %v242 = vld [vmem:[%s241] sm:$0xff]
    %v243 = vld [vmem:[%s241 + $0x8] sm:$0xff]
    %v244 = vld [vmem:[%s241 + $0x10] sm:$0xff]
    %v245 = vld [vmem:[%s241 + $0x18] sm:$0xff]
    %v247 = vsel %vm20, %v242, 0
    %v250 = vsel %vm20, %v243, 0
    %v253 = vsel %vm20, %v244, 0
    %v256 = vsel %vm20, %v245, 0
    %258 = vmatprep.subr.mxu0 0.0
    %259 = vmatpush1.msra.mxu0 0.0
    %260 = vmatprep.subr.mxu0 0.0
    %261 = vmatpush1.msra.mxu0 0.0
    %262 = vmatprep.subr.mxu0 0.0
    %263 = vmatpush1.msra.mxu0 0.0
    %264 = vmatprep.subr.mxu0 0.0
    %265 = vmatpush1.msra.mxu0 0.0
    %266 = vmatprep.subr.mxu0 0.0
    %267 = vmatpush1.msra.mxu0 0.0
    %268 = vmatprep.subr.mxu0 0.0
    %269 = vmatpush1.msra.mxu0 0.0
    %270 = vmatprep.subr.mxu0 0.0
    %271 = vmatpush1.msra.mxu0 0.0
    %272 = vmatprep.subr.mxu0 0.0
    %273 = vmatpush1.msra.mxu0 0.0
    %274 = vmatprep.subr.mxu0 0.0
    %275 = vmatpush1.msra.mxu0 0.0
    %276 = vmatprep.subr.mxu0 0.0
    %277 = vmatpush1.msra.mxu0 0.0
    %278 = vmatprep.subr.mxu0 0.0
    %279 = vmatpush1.msra.mxu0 0.0
    %280 = vmatprep.subr.mxu0 0.0
    %281 = vmatpush1.msra.mxu0 0.0
    %282 = vmatprep.subr.mxu0 0.0
    %283 = vmatpush1.msra.mxu0 0.0
    %284 = vmatprep.subr.mxu0 0.0
    %285 = vmatpush1.msra.mxu0 0.0
    %286 = vmatprep.subr.mxu0 0.0
    %287 = vmatpush1.msra.mxu0 0.0
    %288 = vmatprep.subr.mxu0 %v13
    %289 = vmatpush1.msra.mxu0 %v12
    %290 = vmatprep.subr.mxu0 0.0
    %291 = vmatpush2.msra.mxu0 0.0
    %292 = vmatprep.subr.mxu0 0.0
    %293 = vmatpush2.msra.mxu0 0.0
    %294 = vmatprep.subr.mxu0 0.0
    %295 = vmatpush2.msra.mxu0 0.0
    %296 = vmatprep.subr.mxu0 0.0
    %297 = vmatpush2.msra.mxu0 0.0
    %298 = vmatprep.subr.mxu0 0.0
    %299 = vmatpush2.msra.mxu0 0.0
    %300 = vmatprep.subr.mxu0 0.0
    %301 = vmatpush2.msra.mxu0 0.0
    %302 = vmatprep.subr.mxu0 0.0
    %303 = vmatpush2.msra.mxu0 0.0
    %304 = vmatprep.subr.mxu0 0.0
    %305 = vmatpush2.msra.mxu0 0.0
    %306 = vmatprep.subr.mxu0 0.0
    %307 = vmatpush2.msra.mxu0 0.0
    %308 = vmatprep.subr.mxu0 0.0
    %309 = vmatpush2.msra.mxu0 0.0
    %310 = vmatprep.subr.mxu0 0.0
    %311 = vmatpush2.msra.mxu0 0.0
    %312 = vmatprep.subr.mxu0 0.0
    %313 = vmatpush2.msra.mxu0 0.0
    %314 = vmatprep.subr.mxu0 0.0
    %315 = vmatpush2.msra.mxu0 0.0
    %316 = vmatprep.subr.mxu0 0.0
    %317 = vmatpush2.msra.mxu0 0.0
    %318 = vmatprep.subr.mxu0 0.0
    %319 = vmatpush2.msra.mxu0 0.0
    %320 = vmatprep.subr.mxu0 0.0
    %321 = vmatpush2.msra.mxu0 0.0
    %322 = vmatprep.mubr.f32.mxu0 0.0
    %323 = vmatmul.mubr.f32.gmra.mxu0 %v247
    %v324 = vpop.f32.mrf.mxu0
    %v325 = vadd.f32 0.0, %v324
    %v326 = vpop.f32.mrf.mxu0
    %v327 = vadd.f32 0.0, %v326
    %328 = vmatprep.mubr.f32.mxu0 0.0
    %329 = vmatmul.mubr.f32.gmra.mxu0 %v250
    %v330 = vpop.f32.mrf.mxu0
    %v331 = vadd.f32 0.0, %v330
    %v332 = vpop.f32.mrf.mxu0
    %v333 = vadd.f32 0.0, %v332
    %334 = vmatprep.mubr.f32.mxu0 0.0
    %335 = vmatmul.mubr.f32.gmra.mxu0 %v253
    %v336 = vpop.f32.mrf.mxu0
    %v337 = vadd.f32 0.0, %v336
    %v338 = vpop.f32.mrf.mxu0
    %v339 = vadd.f32 0.0, %v338
    %340 = vmatprep.mubr.f32.mxu0 0.0
    %341 = vmatmul.mubr.f32.gmra.mxu0 %v256
    %v342 = vpop.f32.mrf.mxu0
    %v343 = vadd.f32 0.0, %v342
    %v344 = vpop.f32.mrf.mxu0
    %v345 = vadd.f32 0.0, %v344
    %346 = vdwg.mxu0
    %347 = vmatprep.subr.mxu0 0.0
    %348 = vmatpush1.msra.mxu0 0.0
    %349 = vmatprep.subr.mxu0 0.0
    %350 = vmatpush1.msra.mxu0 0.0
    %351 = vmatprep.subr.mxu0 0.0
    %352 = vmatpush1.msra.mxu0 0.0
    %353 = vmatprep.subr.mxu0 0.0
    %354 = vmatpush1.msra.mxu0 0.0
    %355 = vmatprep.subr.mxu0 0.0
    %356 = vmatpush1.msra.mxu0 0.0
    %357 = vmatprep.subr.mxu0 0.0
    %358 = vmatpush1.msra.mxu0 0.0
    %359 = vmatprep.subr.mxu0 0.0
    %360 = vmatpush1.msra.mxu0 0.0
    %361 = vmatprep.subr.mxu0 0.0
    %362 = vmatpush1.msra.mxu0 0.0
    %363 = vmatprep.subr.mxu0 0.0
    %364 = vmatpush1.msra.mxu0 0.0
    %365 = vmatprep.subr.mxu0 0.0
    %366 = vmatpush1.msra.mxu0 0.0
    %367 = vmatprep.subr.mxu0 0.0
    %368 = vmatpush1.msra.mxu0 0.0
    %369 = vmatprep.subr.mxu0 0.0
    %370 = vmatpush1.msra.mxu0 0.0
    %371 = vmatprep.subr.mxu0 0.0
    %372 = vmatpush1.msra.mxu0 0.0
    %373 = vmatprep.subr.mxu0 0.0
    %374 = vmatpush1.msra.mxu0 0.0
    %375 = vmatprep.subr.mxu0 0.0
    %376 = vmatpush1.msra.mxu0 0.0
    %377 = vmatprep.subr.mxu0 %v15
    %378 = vmatpush1.msra.mxu0 %v14
    %379 = vmatprep.subr.mxu0 0.0
    %380 = vmatpush2.msra.mxu0 0.0
    %381 = vmatprep.subr.mxu0 0.0
    %382 = vmatpush2.msra.mxu0 0.0
    %383 = vmatprep.subr.mxu0 0.0
    %384 = vmatpush2.msra.mxu0 0.0
    %385 = vmatprep.subr.mxu0 0.0
    %386 = vmatpush2.msra.mxu0 0.0
    %387 = vmatprep.subr.mxu0 0.0
    %388 = vmatpush2.msra.mxu0 0.0
    %389 = vmatprep.subr.mxu0 0.0
    %390 = vmatpush2.msra.mxu0 0.0
    %391 = vmatprep.subr.mxu0 0.0
    %392 = vmatpush2.msra.mxu0 0.0
    %393 = vmatprep.subr.mxu0 0.0
    %394 = vmatpush2.msra.mxu0 0.0
    %395 = vmatprep.subr.mxu0 0.0
    %396 = vmatpush2.msra.mxu0 0.0
    %397 = vmatprep.subr.mxu0 0.0
    %398 = vmatpush2.msra.mxu0 0.0
    %399 = vmatprep.subr.mxu0 0.0
    %400 = vmatpush2.msra.mxu0 0.0
    %401 = vmatprep.subr.mxu0 0.0
    %402 = vmatpush2.msra.mxu0 0.0
    %403 = vmatprep.subr.mxu0 0.0
    %404 = vmatpush2.msra.mxu0 0.0
    %405 = vmatprep.subr.mxu0 0.0
    %406 = vmatpush2.msra.mxu0 0.0
    %407 = vmatprep.subr.mxu0 0.0
    %408 = vmatpush2.msra.mxu0 0.0
    %409 = vmatprep.subr.mxu0 0.0
    %410 = vmatpush2.msra.mxu0 0.0
    %411 = vmatprep.mubr.f32.mxu0 0.0
    %412 = vmatmul.mubr.f32.gmra.mxu0 %v247
    %v413 = vpop.f32.mrf.mxu0
    %v414 = vadd.f32 0.0, %v413
    %v415 = vpop.f32.mrf.mxu0
    %v416 = vadd.f32 0.0, %v415
    %417 = vmatprep.mubr.f32.mxu0 0.0
    %418 = vmatmul.mubr.f32.gmra.mxu0 %v250
    %v419 = vpop.f32.mrf.mxu0
    %v420 = vadd.f32 0.0, %v419
    %v421 = vpop.f32.mrf.mxu0
    %v422 = vadd.f32 0.0, %v421
    %423 = vmatprep.mubr.f32.mxu0 0.0
    %424 = vmatmul.mubr.f32.gmra.mxu0 %v253
    %v425 = vpop.f32.mrf.mxu0
    %v426 = vadd.f32 0.0, %v425
    %v427 = vpop.f32.mrf.mxu0
    %v428 = vadd.f32 0.0, %v427
    %429 = vmatprep.mubr.f32.mxu0 0.0
    %430 = vmatmul.mubr.f32.gmra.mxu0 %v256
    %v431 = vpop.f32.mrf.mxu0
    %v432 = vadd.f32 0.0, %v431
    %v433 = vpop.f32.mrf.mxu0
    %v434 = vadd.f32 0.0, %v433
    %435 = vdwg.mxu0
    %v436 = vmul.f32 %v325, %v325
    %v437 = vmul.f32 %v327, %v327
    %v438 = vmul.f32 %v414, %v414
    %v439 = vmul.f32 %v416, %v416
    %v440 = vmul.f32 %v331, %v331
    %v441 = vmul.f32 %v333, %v333
    %v442 = vmul.f32 %v420, %v420
    %v443 = vmul.f32 %v422, %v422
    %v444 = vmul.f32 %v337, %v337
    %v445 = vmul.f32 %v339, %v339
    %v446 = vmul.f32 %v426, %v426
    %v447 = vmul.f32 %v428, %v428
    %v448 = vmul.f32 %v343, %v343
    %v449 = vmul.f32 %v345, %v345
    %v450 = vmul.f32 %v432, %v432
    %v451 = vmul.f32 %v434, %v434
    %v452 = vadd.f32 %v436, %v438
    %v453 = vadd.f32 %v437, %v439
    %v454 = vadd.f32 %v440, %v442
    %v455 = vadd.f32 %v441, %v443
    %v456 = vadd.f32 %v444, %v446
    %v457 = vadd.f32 %v445, %v447
    %v458 = vadd.f32 %v448, %v450
    %v459 = vadd.f32 %v449, %v451
    %v460 = vmul.f32 %v452, %v454
    %v461 = vmul.f32 %v453, %v455
    %v462 = vmul.f32 %v460, %v456
    %v463 = vmul.f32 %v461, %v457
    %v464 = vmul.f32 %v462, %v458
    %v465 = vmul.f32 %v463, %v459
    %s466 = scalar_lea.vmem %s0, 64
    %v467 = vld [vmem:[%s466] sm:$0xff]
    %v468 = vld [vmem:[%s466 + $0x8] sm:$0xff]
    %v469 = vld [vmem:[%s466 + $0x10] sm:$0xff]
    %v470 = vld [vmem:[%s466 + $0x18] sm:$0xff]
    %v472 = vsel %vm20, %v467, 0
    %v475 = vsel %vm20, %v468, 0
    %v478 = vsel %vm20, %v469, 0
    %v481 = vsel %vm20, %v470, 0
    %483 = vmatprep.subr.mxu0 0.0
    %484 = vmatpush1.msra.mxu0 0.0
    %485 = vmatprep.subr.mxu0 0.0
    %486 = vmatpush1.msra.mxu0 0.0
    %487 = vmatprep.subr.mxu0 0.0
    %488 = vmatpush1.msra.mxu0 0.0
    %489 = vmatprep.subr.mxu0 0.0
    %490 = vmatpush1.msra.mxu0 0.0
    %491 = vmatprep.subr.mxu0 0.0
    %492 = vmatpush1.msra.mxu0 0.0
    %493 = vmatprep.subr.mxu0 0.0
    %494 = vmatpush1.msra.mxu0 0.0
    %495 = vmatprep.subr.mxu0 0.0
    %496 = vmatpush1.msra.mxu0 0.0
    %497 = vmatprep.subr.mxu0 0.0
    %498 = vmatpush1.msra.mxu0 0.0
    %499 = vmatprep.subr.mxu0 0.0
    %500 = vmatpush1.msra.mxu0 0.0
    %501 = vmatprep.subr.mxu0 0.0
    %502 = vmatpush1.msra.mxu0 0.0
    %503 = vmatprep.subr.mxu0 0.0
    %504 = vmatpush1.msra.mxu0 0.0
    %505 = vmatprep.subr.mxu0 0.0
    %506 = vmatpush1.msra.mxu0 0.0
    %507 = vmatprep.subr.mxu0 0.0
    %508 = vmatpush1.msra.mxu0 0.0
    %509 = vmatprep.subr.mxu0 0.0
    %510 = vmatpush1.msra.mxu0 0.0
    %511 = vmatprep.subr.mxu0 0.0
    %512 = vmatpush1.msra.mxu0 0.0
    %513 = vmatprep.subr.mxu0 %v13
    %514 = vmatpush1.msra.mxu0 %v12
    %515 = vmatprep.subr.mxu0 0.0
    %516 = vmatpush2.msra.mxu0 0.0
    %517 = vmatprep.subr.mxu0 0.0
    %518 = vmatpush2.msra.mxu0 0.0
    %519 = vmatprep.subr.mxu0 0.0
    %520 = vmatpush2.msra.mxu0 0.0
    %521 = vmatprep.subr.mxu0 0.0
    %522 = vmatpush2.msra.mxu0 0.0
    %523 = vmatprep.subr.mxu0 0.0
    %524 = vmatpush2.msra.mxu0 0.0
    %525 = vmatprep.subr.mxu0 0.0
    %526 = vmatpush2.msra.mxu0 0.0
    %527 = vmatprep.subr.mxu0 0.0
    %528 = vmatpush2.msra.mxu0 0.0
    %529 = vmatprep.subr.mxu0 0.0
    %530 = vmatpush2.msra.mxu0 0.0
    %531 = vmatprep.subr.mxu0 0.0
    %532 = vmatpush2.msra.mxu0 0.0
    %533 = vmatprep.subr.mxu0 0.0
    %534 = vmatpush2.msra.mxu0 0.0
    %535 = vmatprep.subr.mxu0 0.0
    %536 = vmatpush2.msra.mxu0 0.0
    %537 = vmatprep.subr.mxu0 0.0
    %538 = vmatpush2.msra.mxu0 0.0
    %539 = vmatprep.subr.mxu0 0.0
    %540 = vmatpush2.msra.mxu0 0.0
    %541 = vmatprep.subr.mxu0 0.0
    %542 = vmatpush2.msra.mxu0 0.0
    %543 = vmatprep.subr.mxu0 0.0
    %544 = vmatpush2.msra.mxu0 0.0
    %545 = vmatprep.subr.mxu0 0.0
    %546 = vmatpush2.msra.mxu0 0.0
    %547 = vmatprep.mubr.f32.mxu0 0.0
    %548 = vmatmul.mubr.f32.gmra.mxu0 %v472
    %v549 = vpop.f32.mrf.mxu0
    %v550 = vadd.f32 0.0, %v549
    %v551 = vpop.f32.mrf.mxu0
    %v552 = vadd.f32 0.0, %v551
    %553 = vmatprep.mubr.f32.mxu0 0.0
    %554 = vmatmul.mubr.f32.gmra.mxu0 %v475
    %v555 = vpop.f32.mrf.mxu0
    %v556 = vadd.f32 0.0, %v555
    %v557 = vpop.f32.mrf.mxu0
    %v558 = vadd.f32 0.0, %v557
    %559 = vmatprep.mubr.f32.mxu0 0.0
    %560 = vmatmul.mubr.f32.gmra.mxu0 %v478
    %v561 = vpop.f32.mrf.mxu0
    %v562 = vadd.f32 0.0, %v561
    %v563 = vpop.f32.mrf.mxu0
    %v564 = vadd.f32 0.0, %v563
    %565 = vmatprep.mubr.f32.mxu0 0.0
    %566 = vmatmul.mubr.f32.gmra.mxu0 %v481
    %v567 = vpop.f32.mrf.mxu0
    %v568 = vadd.f32 0.0, %v567
    %v569 = vpop.f32.mrf.mxu0
    %v570 = vadd.f32 0.0, %v569
    %571 = vdwg.mxu0
    %572 = vmatprep.subr.mxu0 0.0
    %573 = vmatpush1.msra.mxu0 0.0
    %574 = vmatprep.subr.mxu0 0.0
    %575 = vmatpush1.msra.mxu0 0.0
    %576 = vmatprep.subr.mxu0 0.0
    %577 = vmatpush1.msra.mxu0 0.0
    %578 = vmatprep.subr.mxu0 0.0
    %579 = vmatpush1.msra.mxu0 0.0
    %580 = vmatprep.subr.mxu0 0.0
    %581 = vmatpush1.msra.mxu0 0.0
    %582 = vmatprep.subr.mxu0 0.0
    %583 = vmatpush1.msra.mxu0 0.0
    %584 = vmatprep.subr.mxu0 0.0
    %585 = vmatpush1.msra.mxu0 0.0
    %586 = vmatprep.subr.mxu0 0.0
    %587 = vmatpush1.msra.mxu0 0.0
    %588 = vmatprep.subr.mxu0 0.0
    %589 = vmatpush1.msra.mxu0 0.0
    %590 = vmatprep.subr.mxu0 0.0
    %591 = vmatpush1.msra.mxu0 0.0
    %592 = vmatprep.subr.mxu0 0.0
    %593 = vmatpush1.msra.mxu0 0.0
    %594 = vmatprep.subr.mxu0 0.0
    %595 = vmatpush1.msra.mxu0 0.0
    %596 = vmatprep.subr.mxu0 0.0
    %597 = vmatpush1.msra.mxu0 0.0
    %598 = vmatprep.subr.mxu0 0.0
    %599 = vmatpush1.msra.mxu0 0.0
    %600 = vmatprep.subr.mxu0 0.0
    %601 = vmatpush1.msra.mxu0 0.0
    %602 = vmatprep.subr.mxu0 %v15
    %603 = vmatpush1.msra.mxu0 %v14
    %604 = vmatprep.subr.mxu0 0.0
    %605 = vmatpush2.msra.mxu0 0.0
    %606 = vmatprep.subr.mxu0 0.0
    %607 = vmatpush2.msra.mxu0 0.0
    %608 = vmatprep.subr.mxu0 0.0
    %609 = vmatpush2.msra.mxu0 0.0
    %610 = vmatprep.subr.mxu0 0.0
    %611 = vmatpush2.msra.mxu0 0.0
    %612 = vmatprep.subr.mxu0 0.0
    %613 = vmatpush2.msra.mxu0 0.0
    %614 = vmatprep.subr.mxu0 0.0
    %615 = vmatpush2.msra.mxu0 0.0
    %616 = vmatprep.subr.mxu0 0.0
    %617 = vmatpush2.msra.mxu0 0.0
    %618 = vmatprep.subr.mxu0 0.0
    %619 = vmatpush2.msra.mxu0 0.0
    %620 = vmatprep.subr.mxu0 0.0
    %621 = vmatpush2.msra.mxu0 0.0
    %622 = vmatprep.subr.mxu0 0.0
    %623 = vmatpush2.msra.mxu0 0.0
    %624 = vmatprep.subr.mxu0 0.0
    %625 = vmatpush2.msra.mxu0 0.0
    %626 = vmatprep.subr.mxu0 0.0
    %627 = vmatpush2.msra.mxu0 0.0
    %628 = vmatprep.subr.mxu0 0.0
    %629 = vmatpush2.msra.mxu0 0.0
    %630 = vmatprep.subr.mxu0 0.0
    %631 = vmatpush2.msra.mxu0 0.0
    %632 = vmatprep.subr.mxu0 0.0
    %633 = vmatpush2.msra.mxu0 0.0
    %634 = vmatprep.subr.mxu0 0.0
    %635 = vmatpush2.msra.mxu0 0.0
    %636 = vmatprep.mubr.f32.mxu0 0.0
    %637 = vmatmul.mubr.f32.gmra.mxu0 %v472
    %v638 = vpop.f32.mrf.mxu0
    %v639 = vadd.f32 0.0, %v638
    %v640 = vpop.f32.mrf.mxu0
    %v641 = vadd.f32 0.0, %v640
    %642 = vmatprep.mubr.f32.mxu0 0.0
    %643 = vmatmul.mubr.f32.gmra.mxu0 %v475
    %v644 = vpop.f32.mrf.mxu0
    %v645 = vadd.f32 0.0, %v644
    %v646 = vpop.f32.mrf.mxu0
    %v647 = vadd.f32 0.0, %v646
    %648 = vmatprep.mubr.f32.mxu0 0.0
    %649 = vmatmul.mubr.f32.gmra.mxu0 %v478
    %v650 = vpop.f32.mrf.mxu0
    %v651 = vadd.f32 0.0, %v650
    %v652 = vpop.f32.mrf.mxu0
    %v653 = vadd.f32 0.0, %v652
    %654 = vmatprep.mubr.f32.mxu0 0.0
    %655 = vmatmul.mubr.f32.gmra.mxu0 %v481
    %v656 = vpop.f32.mrf.mxu0
    %v657 = vadd.f32 0.0, %v656
    %v658 = vpop.f32.mrf.mxu0
    %v659 = vadd.f32 0.0, %v658
    %660 = vdwg.mxu0
    %v661 = vmul.f32 %v550, %v550
    %v662 = vmul.f32 %v552, %v552
    %v663 = vmul.f32 %v639, %v639
    %v664 = vmul.f32 %v641, %v641
    %v665 = vmul.f32 %v556, %v556
    %v666 = vmul.f32 %v558, %v558
    %v667 = vmul.f32 %v645, %v645
    %v668 = vmul.f32 %v647, %v647
    %v669 = vmul.f32 %v562, %v562
    %v670 = vmul.f32 %v564, %v564
    %v671 = vmul.f32 %v651, %v651
    %v672 = vmul.f32 %v653, %v653
    %v673 = vmul.f32 %v568, %v568
    %v674 = vmul.f32 %v570, %v570
    %v675 = vmul.f32 %v657, %v657
    %v676 = vmul.f32 %v659, %v659
    %v677 = vadd.f32 %v661, %v663
    %v678 = vadd.f32 %v662, %v664
    %v679 = vadd.f32 %v665, %v667
    %v680 = vadd.f32 %v666, %v668
    %v681 = vadd.f32 %v669, %v671
    %v682 = vadd.f32 %v670, %v672
    %v683 = vadd.f32 %v673, %v675
    %v684 = vadd.f32 %v674, %v676
    %v685 = vmul.f32 %v677, %v679
    %v686 = vmul.f32 %v678, %v680
    %v687 = vmul.f32 %v685, %v681
    %v688 = vmul.f32 %v686, %v682
    %v689 = vmul.f32 %v687, %v683
    %v690 = vmul.f32 %v688, %v684
    %s691 = scalar_lea.vmem %s0, 96
    %v692 = vld [vmem:[%s691] sm:$0xff]
    %v693 = vld [vmem:[%s691 + $0x8] sm:$0xff]
    %v694 = vld [vmem:[%s691 + $0x10] sm:$0xff]
    %v695 = vld [vmem:[%s691 + $0x18] sm:$0xff]
    %v697 = vsel %vm20, %v692, 0
    %v700 = vsel %vm20, %v693, 0
    %v703 = vsel %vm20, %v694, 0
    %v706 = vsel %vm20, %v695, 0
    %708 = vmatprep.subr.mxu0 0.0
    %709 = vmatpush1.msra.mxu0 0.0
    %710 = vmatprep.subr.mxu0 0.0
    %711 = vmatpush1.msra.mxu0 0.0
    %712 = vmatprep.subr.mxu0 0.0
    %713 = vmatpush1.msra.mxu0 0.0
    %714 = vmatprep.subr.mxu0 0.0
    %715 = vmatpush1.msra.mxu0 0.0
    %716 = vmatprep.subr.mxu0 0.0
    %717 = vmatpush1.msra.mxu0 0.0
    %718 = vmatprep.subr.mxu0 0.0
    %719 = vmatpush1.msra.mxu0 0.0
    %720 = vmatprep.subr.mxu0 0.0
    %721 = vmatpush1.msra.mxu0 0.0
    %722 = vmatprep.subr.mxu0 0.0
    %723 = vmatpush1.msra.mxu0 0.0
    %724 = vmatprep.subr.mxu0 0.0
    %725 = vmatpush1.msra.mxu0 0.0
    %726 = vmatprep.subr.mxu0 0.0
    %727 = vmatpush1.msra.mxu0 0.0
    %728 = vmatprep.subr.mxu0 0.0
    %729 = vmatpush1.msra.mxu0 0.0
    %730 = vmatprep.subr.mxu0 0.0
    %731 = vmatpush1.msra.mxu0 0.0
    %732 = vmatprep.subr.mxu0 0.0
    %733 = vmatpush1.msra.mxu0 0.0
    %734 = vmatprep.subr.mxu0 0.0
    %735 = vmatpush1.msra.mxu0 0.0
    %736 = vmatprep.subr.mxu0 0.0
    %737 = vmatpush1.msra.mxu0 0.0
    %738 = vmatprep.subr.mxu0 %v13
    %739 = vmatpush1.msra.mxu0 %v12
    %740 = vmatprep.subr.mxu0 0.0
    %741 = vmatpush2.msra.mxu0 0.0
    %742 = vmatprep.subr.mxu0 0.0
    %743 = vmatpush2.msra.mxu0 0.0
    %744 = vmatprep.subr.mxu0 0.0
    %745 = vmatpush2.msra.mxu0 0.0
    %746 = vmatprep.subr.mxu0 0.0
    %747 = vmatpush2.msra.mxu0 0.0
    %748 = vmatprep.subr.mxu0 0.0
    %749 = vmatpush2.msra.mxu0 0.0
    %750 = vmatprep.subr.mxu0 0.0
    %751 = vmatpush2.msra.mxu0 0.0
    %752 = vmatprep.subr.mxu0 0.0
    %753 = vmatpush2.msra.mxu0 0.0
    %754 = vmatprep.subr.mxu0 0.0
    %755 = vmatpush2.msra.mxu0 0.0
    %756 = vmatprep.subr.mxu0 0.0
    %757 = vmatpush2.msra.mxu0 0.0
    %758 = vmatprep.subr.mxu0 0.0
    %759 = vmatpush2.msra.mxu0 0.0
    %760 = vmatprep.subr.mxu0 0.0
    %761 = vmatpush2.msra.mxu0 0.0
    %762 = vmatprep.subr.mxu0 0.0
    %763 = vmatpush2.msra.mxu0 0.0
    %764 = vmatprep.subr.mxu0 0.0
    %765 = vmatpush2.msra.mxu0 0.0
    %766 = vmatprep.subr.mxu0 0.0
    %767 = vmatpush2.msra.mxu0 0.0
    %768 = vmatprep.subr.mxu0 0.0
    %769 = vmatpush2.msra.mxu0 0.0
    %770 = vmatprep.subr.mxu0 0.0
    %771 = vmatpush2.msra.mxu0 0.0
    %772 = vmatprep.mubr.f32.mxu0 0.0
    %773 = vmatmul.mubr.f32.gmra.mxu0 %v697
    %v774 = vpop.f32.mrf.mxu0
    %v775 = vadd.f32 0.0, %v774
    %v776 = vpop.f32.mrf.mxu0
    %v777 = vadd.f32 0.0, %v776
    %778 = vmatprep.mubr.f32.mxu0 0.0
    %779 = vmatmul.mubr.f32.gmra.mxu0 %v700
    %v780 = vpop.f32.mrf.mxu0
    %v781 = vadd.f32 0.0, %v780
    %v782 = vpop.f32.mrf.mxu0
    %v783 = vadd.f32 0.0, %v782
    %784 = vmatprep.mubr.f32.mxu0 0.0
    %785 = vmatmul.mubr.f32.gmra.mxu0 %v703
    %v786 = vpop.f32.mrf.mxu0
    %v787 = vadd.f32 0.0, %v786
    %v788 = vpop.f32.mrf.mxu0
    %v789 = vadd.f32 0.0, %v788
    %790 = vmatprep.mubr.f32.mxu0 0.0
    %791 = vmatmul.mubr.f32.gmra.mxu0 %v706
    %v792 = vpop.f32.mrf.mxu0
    %v793 = vadd.f32 0.0, %v792
    %v794 = vpop.f32.mrf.mxu0
    %v795 = vadd.f32 0.0, %v794
    %796 = vdwg.mxu0
    %797 = vmatprep.subr.mxu0 0.0
    %798 = vmatpush1.msra.mxu0 0.0
    %799 = vmatprep.subr.mxu0 0.0
    %800 = vmatpush1.msra.mxu0 0.0
    %801 = vmatprep.subr.mxu0 0.0
    %802 = vmatpush1.msra.mxu0 0.0
    %803 = vmatprep.subr.mxu0 0.0
    %804 = vmatpush1.msra.mxu0 0.0
    %805 = vmatprep.subr.mxu0 0.0
    %806 = vmatpush1.msra.mxu0 0.0
    %807 = vmatprep.subr.mxu0 0.0
    %808 = vmatpush1.msra.mxu0 0.0
    %809 = vmatprep.subr.mxu0 0.0
    %810 = vmatpush1.msra.mxu0 0.0
    %811 = vmatprep.subr.mxu0 0.0
    %812 = vmatpush1.msra.mxu0 0.0
    %813 = vmatprep.subr.mxu0 0.0
    %814 = vmatpush1.msra.mxu0 0.0
    %815 = vmatprep.subr.mxu0 0.0
    %816 = vmatpush1.msra.mxu0 0.0
    %817 = vmatprep.subr.mxu0 0.0
    %818 = vmatpush1.msra.mxu0 0.0
    %819 = vmatprep.subr.mxu0 0.0
    %820 = vmatpush1.msra.mxu0 0.0
    %821 = vmatprep.subr.mxu0 0.0
    %822 = vmatpush1.msra.mxu0 0.0
    %823 = vmatprep.subr.mxu0 0.0
    %824 = vmatpush1.msra.mxu0 0.0
    %825 = vmatprep.subr.mxu0 0.0
    %826 = vmatpush1.msra.mxu0 0.0
    %827 = vmatprep.subr.mxu0 %v15
    %828 = vmatpush1.msra.mxu0 %v14
    %829 = vmatprep.subr.mxu0 0.0
    %830 = vmatpush2.msra.mxu0 0.0
    %831 = vmatprep.subr.mxu0 0.0
    %832 = vmatpush2.msra.mxu0 0.0
    %833 = vmatprep.subr.mxu0 0.0
    %834 = vmatpush2.msra.mxu0 0.0
    %835 = vmatprep.subr.mxu0 0.0
    %836 = vmatpush2.msra.mxu0 0.0
    %837 = vmatprep.subr.mxu0 0.0
    %838 = vmatpush2.msra.mxu0 0.0
    %839 = vmatprep.subr.mxu0 0.0
    %840 = vmatpush2.msra.mxu0 0.0
    %841 = vmatprep.subr.mxu0 0.0
    %842 = vmatpush2.msra.mxu0 0.0
    %843 = vmatprep.subr.mxu0 0.0
    %844 = vmatpush2.msra.mxu0 0.0
    %845 = vmatprep.subr.mxu0 0.0
    %846 = vmatpush2.msra.mxu0 0.0
    %847 = vmatprep.subr.mxu0 0.0
    %848 = vmatpush2.msra.mxu0 0.0
    %849 = vmatprep.subr.mxu0 0.0
    %850 = vmatpush2.msra.mxu0 0.0
    %851 = vmatprep.subr.mxu0 0.0
    %852 = vmatpush2.msra.mxu0 0.0
    %853 = vmatprep.subr.mxu0 0.0
    %854 = vmatpush2.msra.mxu0 0.0
    %855 = vmatprep.subr.mxu0 0.0
    %856 = vmatpush2.msra.mxu0 0.0
    %857 = vmatprep.subr.mxu0 0.0
    %858 = vmatpush2.msra.mxu0 0.0
    %859 = vmatprep.subr.mxu0 0.0
    %860 = vmatpush2.msra.mxu0 0.0
    %861 = vmatprep.mubr.f32.mxu0 0.0
    %862 = vmatmul.mubr.f32.gmra.mxu0 %v697
    %v863 = vpop.f32.mrf.mxu0
    %v864 = vadd.f32 0.0, %v863
    %v865 = vpop.f32.mrf.mxu0
    %v866 = vadd.f32 0.0, %v865
    %867 = vmatprep.mubr.f32.mxu0 0.0
    %868 = vmatmul.mubr.f32.gmra.mxu0 %v700
    %v869 = vpop.f32.mrf.mxu0
    %v870 = vadd.f32 0.0, %v869
    %v871 = vpop.f32.mrf.mxu0
    %v872 = vadd.f32 0.0, %v871
    %873 = vmatprep.mubr.f32.mxu0 0.0
    %874 = vmatmul.mubr.f32.gmra.mxu0 %v703
    %v875 = vpop.f32.mrf.mxu0
    %v876 = vadd.f32 0.0, %v875
    %v877 = vpop.f32.mrf.mxu0
    %v878 = vadd.f32 0.0, %v877
    %879 = vmatprep.mubr.f32.mxu0 0.0
    %880 = vmatmul.mubr.f32.gmra.mxu0 %v706
    %v881 = vpop.f32.mrf.mxu0
    %v882 = vadd.f32 0.0, %v881
    %v883 = vpop.f32.mrf.mxu0
    %v884 = vadd.f32 0.0, %v883
    %885 = vdwg.mxu0
    %v886 = vmul.f32 %v775, %v775
    %v887 = vmul.f32 %v777, %v777
    %v888 = vmul.f32 %v864, %v864
    %v889 = vmul.f32 %v866, %v866
    %v890 = vmul.f32 %v781, %v781
    %v891 = vmul.f32 %v783, %v783
    %v892 = vmul.f32 %v870, %v870
    %v893 = vmul.f32 %v872, %v872
    %v894 = vmul.f32 %v787, %v787
    %v895 = vmul.f32 %v789, %v789
    %v896 = vmul.f32 %v876, %v876
    %v897 = vmul.f32 %v878, %v878
    %v898 = vmul.f32 %v793, %v793
    %v899 = vmul.f32 %v795, %v795
    %v900 = vmul.f32 %v882, %v882
    %v901 = vmul.f32 %v884, %v884
    %v902 = vadd.f32 %v886, %v888
    %v903 = vadd.f32 %v887, %v889
    %v904 = vadd.f32 %v890, %v892
    %v905 = vadd.f32 %v891, %v893
    %v906 = vadd.f32 %v894, %v896
    %v907 = vadd.f32 %v895, %v897
    %v908 = vadd.f32 %v898, %v900
    %v909 = vadd.f32 %v899, %v901
    %v910 = vmul.f32 %v902, %v904
    %v911 = vmul.f32 %v903, %v905
    %v912 = vmul.f32 %v910, %v906
    %v913 = vmul.f32 %v911, %v907
    %v914 = vmul.f32 %v912, %v908
    %v915 = vmul.f32 %v913, %v909
    %v916 = vrcp.pop %v464
    %v917 = vrcp.pop %v465
    %v918 = vmul.f32 %v239, %v916
    %v919 = vmul.f32 %v240, %v917
    %v920 = vrsqrt.pop %v918
    %v921 = vmul.f32 %v918, %v920
    %vm922 = vcmp.eq.f32.partialorder %v918, inf
    %v923 = vsel %vm922, %v918, %v921
    %vm924 = vcmp.eq.f32.partialorder %v918, 0.0
    %v925 = vand.u32 %v918, 2147483648
    %v926 = vsel %vm924, %v925, %v923
    %v927 = vrsqrt.pop %v919
    %v928 = vmul.f32 %v919, %v927
    %vm929 = vcmp.eq.f32.partialorder %v919, inf
    %v930 = vsel %vm929, %v919, %v928
    %vm931 = vcmp.eq.f32.partialorder %v919, 0.0
    %v932 = vand.u32 %v919, 2147483648
    %v933 = vsel %vm931, %v932, %v930
    %v934 = vrcp.pop %v914
    %v935 = vrcp.pop %v915
    %v936 = vmul.f32 %v689, %v934
    %v937 = vmul.f32 %v690, %v935
    %v938 = vrsqrt.pop %v936
    %v939 = vmul.f32 %v936, %v938
    %vm940 = vcmp.eq.f32.partialorder %v936, inf
    %v941 = vsel %vm940, %v936, %v939
    %vm942 = vcmp.eq.f32.partialorder %v936, 0.0
    %v943 = vand.u32 %v936, 2147483648
    %v944 = vsel %vm942, %v943, %v941
    %v945 = vrsqrt.pop %v937
    %v946 = vmul.f32 %v937, %v945
    %vm947 = vcmp.eq.f32.partialorder %v937, inf
    %v948 = vsel %vm947, %v937, %v946
    %vm949 = vcmp.eq.f32.partialorder %v937, 0.0
    %v950 = vand.u32 %v937, 2147483648
    %v951 = vsel %vm949, %v950, %v948
    %v952 = vadd.f32 %v926, 1e-08
    %v953 = vadd.f32 %v933, 1e-08
    %v954 = vlog2.pop %v952
    %v955 = vmul.f32 %v954, 0.6931472
    %v956 = vlog2.pop %v953
    %v957 = vmul.f32 %v956, 0.6931472
    %v958 = vmul.f32 %v955, 0.4342945
    %v959 = vmul.f32 %v957, 0.4342945
    %v960 = vmul.f32 %v958, 20.0
    %v961 = vmul.f32 %v959, 20.0
    %v962 = vadd.f32 %v944, 1e-08
    %v963 = vadd.f32 %v951, 1e-08
    %v964 = vlog2.pop %v962
    %v965 = vmul.f32 %v964, 0.6931472
    %v966 = vlog2.pop %v963
    %v967 = vmul.f32 %v966, 0.6931472
    %v968 = vmul.f32 %v965, 0.4342945
    %v969 = vmul.f32 %v967, 0.4342945
    %v970 = vmul.f32 %v968, 20.0
    %v971 = vmul.f32 %v969, 20.0
    %v972 = vsub.f32 %v960, %v970
    %v973 = vsub.f32 %v961, %v971
    %v974 = vmul.f32 %v972, %v972
    %v975 = vmul.f32 %v973, %v973
    %v976 = vadd.f32 %v974, %v975
    %977 = vadd.xlane.f32.xlu0 %v976
    %v978 = vpop.xlane.xlu0 %977
    %v979 = vrot.slane %v978, 4
    %v980 = vadd.f32 %v978, %v979
    %v981 = vrot.slane %v980, 2
    %v982 = vadd.f32 %v980, %v981
    %v983 = vrot.slane %v982, 1
    %v984 = vadd.f32 %v982, %v983
    %985 = vst [vmem:[#allocation2] sm:$0xff] %v984
    // Predicated region
    $region10: #{tpu_custom_call.1} parent=1 // pred_check
      _
    $region11: #{tpu_custom_call.1} parent=1 // pred_check_branch
      %987 = sbr.rel (0) target = $region13
    $region12: #{tpu_custom_call.1} parent=1 // pred_region
      %s989 = ssub.s32 128, 128
      %990 = vsyncadd [#allocation3], %s989
      %s992 = sshll.u32 [#allocation2], 4
      %s993 = int_to_ptr.vmem [resolvable:$true] %s992
      %995 = dma.vmem_to_hbm [thread:$0]  %s993, 128, %s2, [#allocation3]
    $region13: #{tpu_custom_call.1} parent=1 // pred_fallthru
      _
    // Predicated region
    $region14: #{tpu_custom_call.1} parent=1 // pred_check
      _
    $region15: #{tpu_custom_call.1} parent=1 // pred_check_branch
      %997 = sbr.rel (0) target = $region17
    $region16: #{tpu_custom_call.1} parent=1 // pred_region
      %998 = dma.done [#allocation3], 128
    $region17: #{tpu_custom_call.1} parent=1 // pred_fallthru
      _
    %999 = vsyncpa [#allocation3], 1

</llo_original>
